<compile_context>
chip_gen: v6e
topology: v6e:2x2x1
jax: 0.10.0
libtpu: 0.0.40
codegen_flags: <defaults>
</compile_context>

<pallas_src>
import math

import jax
import jax.numpy as jnp
from jax.experimental import pallas as pl
from jax.experimental.pallas import tpu as pltpu

# ---- model hyper-parameters (consistent with the module defaults) ----
RAY_FEATURES = 4
OUT_FEATURES = 3
HIDDEN = 32
HEIGHT = 16
WIDTH = 16
N_SPHERES = 1            # len(np.arange(1, 2, 4)) == 1
LN_EPS = 1e-5            # torch.nn.LayerNorm default
BATCH = 8
B_TILE = 2048            # max batch tile (lane axis) for the grid

# ---- packed parameter slab layout (rows) ----
_W1_OFF = 0                          # rows [0, 32)   : W1^T  (out, in)
_W2_OFF = HIDDEN                     # rows [32, 64)  : W2^T
_W3_OFF = 2 * HIDDEN                 # rows [64, 72)  : W3^T padded to 8 rows
_W3_PAD = 8
_VEC_OFF = _W3_OFF + _W3_PAD         # rows [72, 104) : vector block (32, 32)
_PSLAB_ROWS = _VEC_OFF + HIDDEN      # 104
# vector block column indices
_B0, _G0, _BE0, _B1, _G1, _BE1, _B2, _G2, _BE2, _B3 = range(10)


def _ln_relu(h, gamma, beta):
    """LayerNorm over the feature (sublane) axis, then ReLU.  h: (HIDDEN, bt).

    NOTE(perf): per the review these sublane reductions could optionally be
    moved to the MXU (ones @ h, ones @ h*h) if VALU/XLU is still the binding
    slot after the gather rework; kept as plain reductions for robustness.
    """
    mu = jnp.mean(h, axis=0, keepdims=True)
    var = jnp.mean((h - mu) ** 2, axis=0, keepdims=True)
    h = (h - mu) * jax.lax.rsqrt(var + LN_EPS) * gamma + beta
    return jnp.maximum(h, 0.0)


def learned_ray_kernel(inp_ref, m_ref, p_ref, out_ref):
    bt = inp_ref.shape[1]

    # --- spherical coords -> grid coords (batch on the lane axis) ---
    theta = inp_ref[0:1, :]                       # (1, bt)
    phi = inp_ref[1:2, :]                         # (1, bt)
    tfin = jnp.isfinite(theta)
    pfin = jnp.isfinite(phi)
    finite = jnp.logical_and(tfin, pfin).astype(jnp.float32)   # (1, bt)

    x = jnp.where(tfin, theta, 0.0) * ((WIDTH - 1) / (2.0 * math.pi))
    y = jnp.where(pfin, phi, 0.0) * ((HEIGHT - 1) / math.pi)

    xf_f = jnp.floor(x)
    yf_f = jnp.floor(y)
    x_frac = x - xf_f
    y_frac = y - yf_f
    # Clamp in float BEFORE the int cast (avoids int32 overflow on huge finite
    # angles).  The "ceil" corner is clamped floor+1: equivalent to ceil because
    # its weight (x_frac / y_frac) is exactly 0 when the coordinate is integral.
    xf_c = jnp.clip(xf_f, 0.0, WIDTH - 1)
    yf_c = jnp.clip(yf_f, 0.0, HEIGHT - 1)
    xf = xf_c.astype(jnp.int32)
    xc = jnp.clip(xf_c + 1.0, 0.0, WIDTH - 1).astype(jnp.int32)
    yf = yf_c.astype(jnp.int32)
    yc = jnp.clip(yf_c + 1.0, 0.0, HEIGHT - 1).astype(jnp.int32)

    # --- factorized bilinear weights: wy (H, bt), wx (W, bt), 2 nonzeros/col ---
    rows_h = jax.lax.broadcasted_iota(jnp.int32, (HEIGHT, bt), 0)
    rows_w = jax.lax.broadcasted_iota(jnp.int32, (WIDTH, bt), 0)
    wy_t = (jnp.where(rows_h == yf, 1.0 - y_frac, 0.0)
            + jnp.where(rows_h == yc, y_frac, 0.0)) * finite     # mask here
    wx_t = (jnp.where(rows_w == xf, 1.0 - x_frac, 0.0)
            + jnp.where(rows_w == xc, x_frac, 0.0))

    # --- combined bilinear weights: w_bilin[y*W + x, b] = wy[y, b] * wx[x, b] ---
    w_bilin = (wy_t[:, None, :] * wx_t[None, :, :]).reshape(HEIGHT * WIDTH, bt)

    # --- ONE MXU matmul does gather + first Linear: (32, 256) @ (256, bt) ---
    h = jnp.dot(m_ref[...], w_bilin, preferred_element_type=jnp.float32)
    # h == (bilinear-gathered feats) @ W0, already zeroed for non-finite rays.

    # --- packed MLP parameters ---
    w1 = p_ref[_W1_OFF:_W1_OFF + HIDDEN, :]        # (32, 32)
    w2 = p_ref[_W2_OFF:_W2_OFF + HIDDEN, :]        # (32, 32)
    w3 = p_ref[_W3_OFF:_W3_OFF + _W3_PAD, :]       # (8, 32), rows 3..7 zero
    vecs = p_ref[_VEC_OFF:_VEC_OFF + HIDDEN, :]    # (32, 32)

    def col(j, rows=HIDDEN):
        return vecs[0:rows, j:j + 1]               # (rows, 1) column vector

    b0, g0, be0 = col(_B0), col(_G0), col(_BE0)
    b1, g1, be1 = col(_B1), col(_G1), col(_BE1)
    b2, g2, be2 = col(_B2), col(_G2), col(_BE2)
    b3 = col(_B3, rows=_W3_PAD)                    # (8, 1)

    # --- MLP: [Linear + LayerNorm + ReLU] x 3 + Linear, activations (HIDDEN, bt) ---
    h = _ln_relu(h + b0, g0, be0)
    h = _ln_relu(jnp.dot(w1, h, preferred_element_type=jnp.float32) + b1, g1, be1)
    h = _ln_relu(jnp.dot(w2, h, preferred_element_type=jnp.float32) + b2, g2, be2)
    h3 = jnp.dot(w3, h, preferred_element_type=jnp.float32) + b3   # (8, bt)
    out_ref[...] = h3[0:OUT_FEATURES, :]


def init_params(key):
    keys = jax.random.split(key, 10)
    img4d = jax.random.uniform(
        keys[0], (N_SPHERES, HEIGHT, WIDTH, RAY_FEATURES), dtype=jnp.float32)

    def linear(k, fan_in, fan_out):
        kw, kb = jax.random.split(k)
        bound = 1.0 / math.sqrt(fan_in)
        w = jax.random.uniform(kw, (fan_in, fan_out), jnp.float32, -bound, bound)
        b = jax.random.uniform(kb, (1, fan_out), jnp.float32, -bound, bound)
        return w, b

    w0, b0 = linear(keys[1], N_SPHERES * RAY_FEATURES, HIDDEN)
    w1, b1 = linear(keys[2], HIDDEN, HIDDEN)
    w2, b2 = linear(keys[3], HIDDEN, HIDDEN)
    w3, b3 = linear(keys[4], HIDDEN, OUT_FEATURES)
    ones = jnp.ones((1, HIDDEN), jnp.float32)
    zeros = jnp.zeros((1, HIDDEN), jnp.float32)
    return {
        "sphere_features": img4d,
        "w0": w0, "b0": b0, "g0": ones, "be0": zeros,
        "w1": w1, "b1": b1, "g1": ones, "be1": zeros,
        "w2": w2, "b2": b2, "g2": ones, "be2": zeros,
        "w3": w3, "b3": b3,
    }


def pack_params(params):
    """Fold W0 into the image and pack everything else into one slab.

    Called ONCE (hoisted out of the per-forward path).
    """
    img = params["sphere_features"][0]                   # (H, W, C)
    w0 = params["w0"]                                    # (C, HIDDEN)
    img_w0 = jnp.einsum("ywc,ch->ywh", img, w0)          # (H, W, HIDDEN)
    # m[h, y*W + x] = img_w0[y, x, h]  -> lane-dense (32, 256) gather matrix.
    m = img_w0.reshape(HEIGHT * WIDTH, HIDDEN).T

    w3p = jnp.zeros((_W3_PAD, HIDDEN), jnp.float32).at[:OUT_FEATURES, :].set(
        params["w3"].T)
    cols = [params[k].reshape(HIDDEN, 1) for k in
            ("b0", "g0", "be0", "b1", "g1", "be1", "b2", "g2", "be2")]
    b3c = jnp.zeros((HIDDEN, 1), jnp.float32).at[:OUT_FEATURES, :].set(
        params["b3"].reshape(OUT_FEATURES, 1))
    cols.append(b3c)
    vblock = jnp.concatenate(
        cols + [jnp.zeros((HIDDEN, HIDDEN - len(cols)), jnp.float32)], axis=1)
    pslab = jnp.concatenate(
        [params["w1"].T, params["w2"].T, w3p, vblock], axis=0)   # (104, 32)
    return m, pslab


def _tile_for_batch(B, max_tile=B_TILE):
    """Pick (tile, n_tiles).  Aim for >=2 tiles (v7x has 2 TCs on the parallel
    axis) with lane-multiple-of-256 tiles once the batch is large enough."""
    if B <= 256:
        return B, 1                         # single tile == full array, no pad
    half = -(-B // 2)                       # cdiv(B, 2)
    bt = min(max_tile, ((half + 255) // 256) * 256)
    n_tiles = -(-B // bt)
    return bt, n_tiles


@jax.jit
def learned_ray_forward(inputs, m, pslab):
    """inputs: (B, 2) spherical coords.  m, pslab: from pack_params."""
    B = inputs.shape[0]
    inp_t = inputs.T.astype(jnp.float32)                 # (2, B) — batch on lanes

    bt, n_tiles = _tile_for_batch(B)
    b_pad = bt * n_tiles
    if b_pad != B:
        inp_t = jnp.pad(inp_t, ((0, 0), (0, b_pad - B)))

    out_t = pl.pallas_call(
        learned_ray_kernel,
        out_shape=jax.ShapeDtypeStruct((OUT_FEATURES, b_pad), jnp.float32),
        grid_spec=pltpu.PrefetchScalarGridSpec(
            num_scalar_prefetch=0,
            grid=(n_tiles,),
            in_specs=[
                pl.BlockSpec((2, bt), lambda i: (0, i)),                     # rays
                pl.BlockSpec((HIDDEN, HEIGHT * WIDTH), lambda i: (0, 0)),    # img@W0
                pl.BlockSpec((_PSLAB_ROWS, HIDDEN), lambda i: (0, 0)),       # params
            ],
            out_specs=pl.BlockSpec((OUT_FEATURES, bt), lambda i: (0, i)),
        ),
        compiler_params=pltpu.CompilerParams(
            dimension_semantics=("parallel",)),
    )(inp_t, m, pslab)
    return out_t[:, :B].T                                # back to (B, OUT_FEATURES)


def reference_forward(inputs, params):
    """Pure-JAX reference mirroring the PyTorch forward."""
    def lerp(a, b, w):
        return a + (b - a) * w

    theta = inputs[:, 0] / (2.0 * math.pi)
    phi = inputs[:, 1] / math.pi
    t = jnp.where(jnp.isfinite(theta), theta, 0.0)
    p = jnp.where(jnp.isfinite(phi), phi, 0.0)
    img = params["sphere_features"][0]
    x = t * (WIDTH - 1)
    y = p * (HEIGHT - 1)
    xf = jnp.floor(x).astype(jnp.int32)
    xc = jnp.ceil(x).astype(jnp.int32)
    yf = jnp.floor(y).astype(jnp.int32)
    yc = jnp.ceil(y).astype(jnp.int32)
    xfr = (x - jnp.floor(x))[:, None]
    yfr = (y - jnp.floor(y))[:, None]
    i1 = lerp(img[yf, xf], img[yf, xc], xfr)
    i2 = lerp(img[yc, xf], img[yc, xc], xfr)
    feats = lerp(i1, i2, yfr)
    mask = jnp.logical_and(jnp.isfinite(theta), jnp.isfinite(phi))[:, None]
    feats = jnp.where(mask, feats, 0.0)

    def ln(h, g, b):
        mu = jnp.mean(h, -1, keepdims=True)
        var = jnp.mean((h - mu) ** 2, -1, keepdims=True)
        return (h - mu) * jax.lax.rsqrt(var + LN_EPS) * g + b

    h = feats @ params["w0"] + params["b0"]
    h = jnp.maximum(ln(h, params["g0"], params["be0"]), 0.0)
    h = h @ params["w1"] + params["b1"]
    h = jnp.maximum(ln(h, params["g1"], params["be1"]), 0.0)
    h = h @ params["w2"] + params["b2"]
    h = jnp.maximum(ln(h, params["g2"], params["be2"]), 0.0)
    return h @ params["w3"] + params["b3"]


if __name__ == "__main__":
    key = jax.random.PRNGKey(0)
    pkey, ikey = jax.random.split(key)
    params = init_params(pkey)
    m, pslab = pack_params(params)        # packed once, reused across calls

    # small batch (single grid step)
    theta_in = jax.random.uniform(ikey, (BATCH, 1), jnp.float32, 0.0, 2.0 * math.pi)
    phi_in = jax.random.uniform(jax.random.fold_in(ikey, 1), (BATCH, 1),
                                jnp.float32, 0.0, math.pi)
    inputs = jnp.concatenate([theta_in, phi_in], axis=-1)
    inputs = inputs.at[0, 0].set(jnp.inf)   # exercise the non-finite masking branch

    out = jax.block_until_ready(learned_ray_forward(inputs, m, pslab))
    ref = reference_forward(inputs, params)
    assert out.shape == (BATCH, OUT_FEATURES)
    assert jnp.max(jnp.abs(out - ref)) < 1e-3, "mismatch vs JAX reference (small batch)"

    # larger batch exercising the batch grid (2 tiles) + lane padding
    BIG = 1000
    kt = jax.random.fold_in(ikey, 2)
    th = jax.random.uniform(kt, (BIG, 1), jnp.float32, 0.0, 2.0 * math.pi)
    ph = jax.random.uniform(jax.random.fold_in(kt, 1), (BIG, 1),
                            jnp.float32, 0.0, math.pi)
    big_inputs = jnp.concatenate([th, ph], axis=-1).at[3, 1].set(jnp.nan)
    big_out = jax.block_until_ready(learned_ray_forward(big_inputs, m, pslab))
    big_ref = reference_forward(big_inputs, params)
    assert big_out.shape == (BIG, OUT_FEATURES)
    assert jnp.max(jnp.abs(big_out - big_ref)) < 1e-3, "mismatch vs JAX reference (big batch)"

    print("KERNEL_OK")
</pallas_src>

<mosaic_0001>
module attributes {stable_mosaic.version = 11 : i64} {
  func.func @learned_ray_kernel(%arg0: i32, %arg1: memref<2x8xf32, #tpu.memory_space<vmem>>, %arg2: memref<32x256xf32, #tpu.memory_space<vmem>>, %arg3: memref<104x32xf32, #tpu.memory_space<vmem>>, %arg4: memref<3x8xf32, #tpu.memory_space<vmem>>) attributes {dimension_semantics = [#tpu.dimension_semantics<parallel>], iteration_bounds = array<i64: 1>, scalar_prefetch = 0 : i64, scratch_operands = 0 : i64, tpu.core_type = #tpu.core_type<tc>, window_params = [{transform_indices = @transform_0, window_bounds = array<i64: 2, 8>}, {pipeline_mode = #tpu.pipeline_mode<synchronous>, transform_indices = @transform_1, window_bounds = array<i64: 32, 256>}, {pipeline_mode = #tpu.pipeline_mode<synchronous>, transform_indices = @transform_2, window_bounds = array<i64: 104, 32>}, {transform_indices = @transform_3, window_bounds = array<i64: 3, 8>}]} {
    %c0 = arith.constant 0 : index
    %c0_0 = arith.constant 0 : index
    %0 = vector.load %arg1[%c0, %c0_0] : memref<2x8xf32, #tpu.memory_space<vmem>>, vector<1x8xf32>
    %c1 = arith.constant 1 : index
    %c0_1 = arith.constant 0 : index
    %1 = vector.load %arg1[%c1, %c0_1] : memref<2x8xf32, #tpu.memory_space<vmem>>, vector<1x8xf32>
    %2 = tpu.weird %0 : vector<1x8xf32> -> vector<1x8xi1>
    %cst = arith.constant dense<true> : vector<1x8xi1>
    %3 = arith.xori %2, %cst : vector<1x8xi1>
    %4 = tpu.weird %1 : vector<1x8xf32> -> vector<1x8xi1>
    %cst_2 = arith.constant dense<true> : vector<1x8xi1>
    %5 = arith.xori %4, %cst_2 : vector<1x8xi1>
    %6 = arith.andi %3, %5 : vector<1x8xi1>
    %7 = arith.extui %6 : vector<1x8xi1> to vector<1x8xi32>
    %8 = arith.sitofp %7 : vector<1x8xi32> to vector<1x8xf32>
    %cst_3 = arith.constant 0.000000e+00 : f32
    %9 = vector.broadcast %cst_3 : f32 to vector<1x8xf32>
    %10 = arith.select %3, %0, %9 : vector<1x8xi1>, vector<1x8xf32>
    %cst_4 = arith.constant 2.38732409 : f32
    %11 = vector.broadcast %cst_4 : f32 to vector<1x8xf32>
    %12 = arith.mulf %10, %11 : vector<1x8xf32>
    %cst_5 = arith.constant 0.000000e+00 : f32
    %13 = vector.broadcast %cst_5 : f32 to vector<1x8xf32>
    %14 = arith.select %5, %1, %13 : vector<1x8xi1>, vector<1x8xf32>
    %cst_6 = arith.constant 4.77464819 : f32
    %15 = vector.broadcast %cst_6 : f32 to vector<1x8xf32>
    %16 = arith.mulf %14, %15 : vector<1x8xf32>
    %17 = math.floor %12 : vector<1x8xf32>
    %18 = math.floor %16 : vector<1x8xf32>
    %19 = arith.subf %12, %17 : vector<1x8xf32>
    %20 = arith.subf %16, %18 : vector<1x8xf32>
    %cst_7 = arith.constant 0.000000e+00 : f32
    %c15_i32 = arith.constant 15 : i32
    %21 = vector.broadcast %cst_7 : f32 to vector<1x8xf32>
    %22 = arith.maximumf %21, %17 : vector<1x8xf32>
    %23 = arith.sitofp %c15_i32 : i32 to f32
    %24 = vector.broadcast %23 : f32 to vector<1x8xf32>
    %25 = arith.minimumf %24, %22 : vector<1x8xf32>
    %cst_8 = arith.constant 0.000000e+00 : f32
    %c15_i32_9 = arith.constant 15 : i32
    %26 = vector.broadcast %cst_8 : f32 to vector<1x8xf32>
    %27 = arith.maximumf %26, %18 : vector<1x8xf32>
    %28 = arith.sitofp %c15_i32_9 : i32 to f32
    %29 = vector.broadcast %28 : f32 to vector<1x8xf32>
    %30 = arith.minimumf %29, %27 : vector<1x8xf32>
    %31 = arith.fptosi %25 : vector<1x8xf32> to vector<1x8xi32>
    %cst_10 = arith.constant 1.000000e+00 : f32
    %32 = vector.broadcast %cst_10 : f32 to vector<1x8xf32>
    %33 = arith.addf %25, %32 : vector<1x8xf32>
    %cst_11 = arith.constant 0.000000e+00 : f32
    %c15_i32_12 = arith.constant 15 : i32
    %34 = vector.broadcast %cst_11 : f32 to vector<1x8xf32>
    %35 = arith.maximumf %34, %33 : vector<1x8xf32>
    %36 = arith.sitofp %c15_i32_12 : i32 to f32
    %37 = vector.broadcast %36 : f32 to vector<1x8xf32>
    %38 = arith.minimumf %37, %35 : vector<1x8xf32>
    %39 = arith.fptosi %38 : vector<1x8xf32> to vector<1x8xi32>
    %40 = arith.fptosi %30 : vector<1x8xf32> to vector<1x8xi32>
    %cst_13 = arith.constant 1.000000e+00 : f32
    %41 = vector.broadcast %cst_13 : f32 to vector<1x8xf32>
    %42 = arith.addf %30, %41 : vector<1x8xf32>
    %cst_14 = arith.constant 0.000000e+00 : f32
    %c15_i32_15 = arith.constant 15 : i32
    %43 = vector.broadcast %cst_14 : f32 to vector<1x8xf32>
    %44 = arith.maximumf %43, %42 : vector<1x8xf32>
    %45 = arith.sitofp %c15_i32_15 : i32 to f32
    %46 = vector.broadcast %45 : f32 to vector<1x8xf32>
    %47 = arith.minimumf %46, %44 : vector<1x8xf32>
    %48 = arith.fptosi %47 : vector<1x8xf32> to vector<1x8xi32>
    %49 = tpu.iota {dimensions = array<i32: 0>} : vector<16x8xi32>
    %50 = tpu.iota {dimensions = array<i32: 0>} : vector<16x8xi32>
    %51 = vector.broadcast %40 : vector<1x8xi32> to vector<16x8xi32>
    %52 = arith.cmpi eq, %49, %51 : vector<16x8xi32>
    %cst_16 = arith.constant 1.000000e+00 : f32
    %53 = vector.broadcast %cst_16 : f32 to vector<1x8xf32>
    %54 = arith.subf %53, %20 : vector<1x8xf32>
    %cst_17 = arith.constant 0.000000e+00 : f32
    %55 = vector.shape_cast %54 : vector<1x8xf32> to vector<1x8xf32>
    %56 = vector.broadcast %55 : vector<1x8xf32> to vector<16x8xf32>
    %57 = vector.broadcast %cst_17 : f32 to vector<16x8xf32>
    %58 = arith.select %52, %56, %57 : vector<16x8xi1>, vector<16x8xf32>
    %59 = vector.broadcast %48 : vector<1x8xi32> to vector<16x8xi32>
    %60 = arith.cmpi eq, %49, %59 : vector<16x8xi32>
    %cst_18 = arith.constant 0.000000e+00 : f32
    %61 = vector.shape_cast %20 : vector<1x8xf32> to vector<1x8xf32>
    %62 = vector.broadcast %61 : vector<1x8xf32> to vector<16x8xf32>
    %63 = vector.broadcast %cst_18 : f32 to vector<16x8xf32>
    %64 = arith.select %60, %62, %63 : vector<16x8xi1>, vector<16x8xf32>
    %65 = arith.addf %58, %64 : vector<16x8xf32>
    %66 = vector.broadcast %8 : vector<1x8xf32> to vector<16x8xf32>
    %67 = arith.mulf %65, %66 : vector<16x8xf32>
    %68 = vector.broadcast %31 : vector<1x8xi32> to vector<16x8xi32>
    %69 = arith.cmpi eq, %50, %68 : vector<16x8xi32>
    %cst_19 = arith.constant 1.000000e+00 : f32
    %70 = vector.broadcast %cst_19 : f32 to vector<1x8xf32>
    %71 = arith.subf %70, %19 : vector<1x8xf32>
    %cst_20 = arith.constant 0.000000e+00 : f32
    %72 = vector.shape_cast %71 : vector<1x8xf32> to vector<1x8xf32>
    %73 = vector.broadcast %72 : vector<1x8xf32> to vector<16x8xf32>
    %74 = vector.broadcast %cst_20 : f32 to vector<16x8xf32>
    %75 = arith.select %69, %73, %74 : vector<16x8xi1>, vector<16x8xf32>
    %76 = vector.broadcast %39 : vector<1x8xi32> to vector<16x8xi32>
    %77 = arith.cmpi eq, %50, %76 : vector<16x8xi32>
    %cst_21 = arith.constant 0.000000e+00 : f32
    %78 = vector.shape_cast %19 : vector<1x8xf32> to vector<1x8xf32>
    %79 = vector.broadcast %78 : vector<1x8xf32> to vector<16x8xf32>
    %80 = vector.broadcast %cst_21 : f32 to vector<16x8xf32>
    %81 = arith.select %77, %79, %80 : vector<16x8xi1>, vector<16x8xf32>
    %82 = arith.addf %75, %81 : vector<16x8xf32>
    %83 = vector.shape_cast %67 : vector<16x8xf32> to vector<16x1x8xf32>
    %84 = vector.shape_cast %82 : vector<16x8xf32> to vector<1x16x8xf32>
    %85 = vector.broadcast %83 : vector<16x1x8xf32> to vector<16x16x8xf32>
    %86 = vector.broadcast %84 : vector<1x16x8xf32> to vector<16x16x8xf32>
    %87 = arith.mulf %85, %86 : vector<16x16x8xf32>
    %88 = vector.shape_cast %87 : vector<16x16x8xf32> to vector<256x8xf32>
    %c0_22 = arith.constant 0 : index
    %c0_23 = arith.constant 0 : index
    %89 = vector.load %arg2[%c0_22, %c0_23] : memref<32x256xf32, #tpu.memory_space<vmem>>, vector<32x256xf32>
    %cst_24 = arith.constant dense<0.000000e+00> : vector<32x8xf32>
    %90 = tpu.matmul %89, %88, %cst_24 {dimension_numbers = #tpu.dot_dimension_numbers<[1], [0], [0], [1], [0, 0, 1, 1], [], []>} : vector<32x256xf32>, vector<256x8xf32>, vector<32x8xf32> -> vector<32x8xf32>
    %c0_25 = arith.constant 0 : index
    %c0_26 = arith.constant 0 : index
    %91 = vector.load %arg3[%c0_25, %c0_26] : memref<104x32xf32, #tpu.memory_space<vmem>>, vector<32x32xf32>
    %c32 = arith.constant 32 : index
    %c0_27 = arith.constant 0 : index
    %92 = vector.load %arg3[%c32, %c0_27] : memref<104x32xf32, #tpu.memory_space<vmem>>, vector<32x32xf32>
    %c64 = arith.constant 64 : index
    %c0_28 = arith.constant 0 : index
    %93 = vector.load %arg3[%c64, %c0_28] : memref<104x32xf32, #tpu.memory_space<vmem>>, vector<8x32xf32>
    %c72 = arith.constant 72 : index
    %c0_29 = arith.constant 0 : index
    %94 = vector.load %arg3[%c72, %c0_29] : memref<104x32xf32, #tpu.memory_space<vmem>>, vector<32x32xf32>
    %95 = vector.extract_strided_slice %94 {offsets = [0, 0], sizes = [32, 1], strides = [1, 1]} : vector<32x32xf32> to vector<32x1xf32>
    %96 = vector.extract_strided_slice %94 {offsets = [0, 1], sizes = [32, 1], strides = [1, 1]} : vector<32x32xf32> to vector<32x1xf32>
    %97 = vector.extract_strided_slice %94 {offsets = [0, 2], sizes = [32, 1], strides = [1, 1]} : vector<32x32xf32> to vector<32x1xf32>
    %98 = vector.extract_strided_slice %94 {offsets = [0, 3], sizes = [32, 1], strides = [1, 1]} : vector<32x32xf32> to vector<32x1xf32>
    %99 = vector.extract_strided_slice %94 {offsets = [0, 4], sizes = [32, 1], strides = [1, 1]} : vector<32x32xf32> to vector<32x1xf32>
    %100 = vector.extract_strided_slice %94 {offsets = [0, 5], sizes = [32, 1], strides = [1, 1]} : vector<32x32xf32> to vector<32x1xf32>
    %101 = vector.extract_strided_slice %94 {offsets = [0, 6], sizes = [32, 1], strides = [1, 1]} : vector<32x32xf32> to vector<32x1xf32>
    %102 = vector.extract_strided_slice %94 {offsets = [0, 7], sizes = [32, 1], strides = [1, 1]} : vector<32x32xf32> to vector<32x1xf32>
    %103 = vector.extract_strided_slice %94 {offsets = [0, 8], sizes = [32, 1], strides = [1, 1]} : vector<32x32xf32> to vector<32x1xf32>
    %104 = vector.extract_strided_slice %94 {offsets = [0, 9], sizes = [8, 1], strides = [1, 1]} : vector<32x32xf32> to vector<8x1xf32>
    %105 = vector.broadcast %95 : vector<32x1xf32> to vector<32x8xf32>
    %106 = arith.addf %90, %105 : vector<32x8xf32>
    %cst_30 = arith.constant dense<0.000000e+00> : vector<8xf32>
    %107 = vector.multi_reduction <add>, %106, %cst_30 [0] : vector<32x8xf32> to vector<8xf32>
    %108 = vector.shape_cast %107 : vector<8xf32> to vector<1x8xf32>
    %cst_31 = arith.constant 3.200000e+01 : f32
    %109 = vector.broadcast %cst_31 : f32 to vector<1x8xf32>
    %110 = arith.divf %108, %109 : vector<1x8xf32>
    %111 = vector.broadcast %110 : vector<1x8xf32> to vector<32x8xf32>
    %112 = arith.subf %106, %111 : vector<32x8xf32>
    %113 = arith.mulf %112, %112 : vector<32x8xf32>
    %cst_32 = arith.constant dense<0.000000e+00> : vector<8xf32>
    %114 = vector.multi_reduction <add>, %113, %cst_32 [0] : vector<32x8xf32> to vector<8xf32>
    %115 = vector.shape_cast %114 : vector<8xf32> to vector<1x8xf32>
    %cst_33 = arith.constant 3.200000e+01 : f32
    %116 = vector.broadcast %cst_33 : f32 to vector<1x8xf32>
    %117 = arith.divf %115, %116 : vector<1x8xf32>
    %118 = vector.broadcast %110 : vector<1x8xf32> to vector<32x8xf32>
    %119 = arith.subf %106, %118 : vector<32x8xf32>
    %cst_34 = arith.constant 9.99999974E-6 : f32
    %120 = vector.broadcast %cst_34 : f32 to vector<1x8xf32>
    %121 = arith.addf %117, %120 : vector<1x8xf32>
    %122 = math.rsqrt %121 : vector<1x8xf32>
    %123 = vector.broadcast %122 : vector<1x8xf32> to vector<32x8xf32>
    %124 = arith.mulf %119, %123 : vector<32x8xf32>
    %125 = vector.broadcast %96 : vector<32x1xf32> to vector<32x8xf32>
    %126 = arith.mulf %124, %125 : vector<32x8xf32>
    %127 = vector.broadcast %97 : vector<32x1xf32> to vector<32x8xf32>
    %128 = arith.addf %126, %127 : vector<32x8xf32>
    %cst_35 = arith.constant 0.000000e+00 : f32
    %129 = vector.broadcast %cst_35 : f32 to vector<32x8xf32>
    %130 = arith.maximumf %128, %129 : vector<32x8xf32>
    %cst_36 = arith.constant dense<0.000000e+00> : vector<32x8xf32>
    %131 = tpu.matmul %91, %130, %cst_36 {dimension_numbers = #tpu.dot_dimension_numbers<[1], [0], [0], [1], [0, 0, 1, 1], [], []>} : vector<32x32xf32>, vector<32x8xf32>, vector<32x8xf32> -> vector<32x8xf32>
    %132 = vector.broadcast %98 : vector<32x1xf32> to vector<32x8xf32>
    %133 = arith.addf %131, %132 : vector<32x8xf32>
    %cst_37 = arith.constant dense<0.000000e+00> : vector<8xf32>
    %134 = vector.multi_reduction <add>, %133, %cst_37 [0] : vector<32x8xf32> to vector<8xf32>
    %135 = vector.shape_cast %134 : vector<8xf32> to vector<1x8xf32>
    %cst_38 = arith.constant 3.200000e+01 : f32
    %136 = vector.broadcast %cst_38 : f32 to vector<1x8xf32>
    %137 = arith.divf %135, %136 : vector<1x8xf32>
    %138 = vector.broadcast %137 : vector<1x8xf32> to vector<32x8xf32>
    %139 = arith.subf %133, %138 : vector<32x8xf32>
    %140 = arith.mulf %139, %139 : vector<32x8xf32>
    %cst_39 = arith.constant dense<0.000000e+00> : vector<8xf32>
    %141 = vector.multi_reduction <add>, %140, %cst_39 [0] : vector<32x8xf32> to vector<8xf32>
    %142 = vector.shape_cast %141 : vector<8xf32> to vector<1x8xf32>
    %cst_40 = arith.constant 3.200000e+01 : f32
    %143 = vector.broadcast %cst_40 : f32 to vector<1x8xf32>
    %144 = arith.divf %142, %143 : vector<1x8xf32>
    %145 = vector.broadcast %137 : vector<1x8xf32> to vector<32x8xf32>
    %146 = arith.subf %133, %145 : vector<32x8xf32>
    %cst_41 = arith.constant 9.99999974E-6 : f32
    %147 = vector.broadcast %cst_41 : f32 to vector<1x8xf32>
    %148 = arith.addf %144, %147 : vector<1x8xf32>
    %149 = math.rsqrt %148 : vector<1x8xf32>
    %150 = vector.broadcast %149 : vector<1x8xf32> to vector<32x8xf32>
    %151 = arith.mulf %146, %150 : vector<32x8xf32>
    %152 = vector.broadcast %99 : vector<32x1xf32> to vector<32x8xf32>
    %153 = arith.mulf %151, %152 : vector<32x8xf32>
    %154 = vector.broadcast %100 : vector<32x1xf32> to vector<32x8xf32>
    %155 = arith.addf %153, %154 : vector<32x8xf32>
    %cst_42 = arith.constant 0.000000e+00 : f32
    %156 = vector.broadcast %cst_42 : f32 to vector<32x8xf32>
    %157 = arith.maximumf %155, %156 : vector<32x8xf32>
    %cst_43 = arith.constant dense<0.000000e+00> : vector<32x8xf32>
    %158 = tpu.matmul %92, %157, %cst_43 {dimension_numbers = #tpu.dot_dimension_numbers<[1], [0], [0], [1], [0, 0, 1, 1], [], []>} : vector<32x32xf32>, vector<32x8xf32>, vector<32x8xf32> -> vector<32x8xf32>
    %159 = vector.broadcast %101 : vector<32x1xf32> to vector<32x8xf32>
    %160 = arith.addf %158, %159 : vector<32x8xf32>
    %cst_44 = arith.constant dense<0.000000e+00> : vector<8xf32>
    %161 = vector.multi_reduction <add>, %160, %cst_44 [0] : vector<32x8xf32> to vector<8xf32>
    %162 = vector.shape_cast %161 : vector<8xf32> to vector<1x8xf32>
    %cst_45 = arith.constant 3.200000e+01 : f32
    %163 = vector.broadcast %cst_45 : f32 to vector<1x8xf32>
    %164 = arith.divf %162, %163 : vector<1x8xf32>
    %165 = vector.broadcast %164 : vector<1x8xf32> to vector<32x8xf32>
    %166 = arith.subf %160, %165 : vector<32x8xf32>
    %167 = arith.mulf %166, %166 : vector<32x8xf32>
    %cst_46 = arith.constant dense<0.000000e+00> : vector<8xf32>
    %168 = vector.multi_reduction <add>, %167, %cst_46 [0] : vector<32x8xf32> to vector<8xf32>
    %169 = vector.shape_cast %168 : vector<8xf32> to vector<1x8xf32>
    %cst_47 = arith.constant 3.200000e+01 : f32
    %170 = vector.broadcast %cst_47 : f32 to vector<1x8xf32>
    %171 = arith.divf %169, %170 : vector<1x8xf32>
    %172 = vector.broadcast %164 : vector<1x8xf32> to vector<32x8xf32>
    %173 = arith.subf %160, %172 : vector<32x8xf32>
    %cst_48 = arith.constant 9.99999974E-6 : f32
    %174 = vector.broadcast %cst_48 : f32 to vector<1x8xf32>
    %175 = arith.addf %171, %174 : vector<1x8xf32>
    %176 = math.rsqrt %175 : vector<1x8xf32>
    %177 = vector.broadcast %176 : vector<1x8xf32> to vector<32x8xf32>
    %178 = arith.mulf %173, %177 : vector<32x8xf32>
    %179 = vector.broadcast %102 : vector<32x1xf32> to vector<32x8xf32>
    %180 = arith.mulf %178, %179 : vector<32x8xf32>
    %181 = vector.broadcast %103 : vector<32x1xf32> to vector<32x8xf32>
    %182 = arith.addf %180, %181 : vector<32x8xf32>
    %cst_49 = arith.constant 0.000000e+00 : f32
    %183 = vector.broadcast %cst_49 : f32 to vector<32x8xf32>
    %184 = arith.maximumf %182, %183 : vector<32x8xf32>
    %cst_50 = arith.constant dense<0.000000e+00> : vector<8x8xf32>
    %185 = tpu.matmul %93, %184, %cst_50 {dimension_numbers = #tpu.dot_dimension_numbers<[1], [0], [0], [1], [0, 0, 1, 1], [], []>} : vector<8x32xf32>, vector<32x8xf32>, vector<8x8xf32> -> vector<8x8xf32>
    %186 = vector.broadcast %104 : vector<8x1xf32> to vector<8x8xf32>
    %187 = arith.addf %185, %186 : vector<8x8xf32>
    %188 = vector.extract_strided_slice %187 {offsets = [0, 0], sizes = [3, 8], strides = [1, 1]} : vector<8x8xf32> to vector<3x8xf32>
    %c0_51 = arith.constant 0 : index
    %c0_52 = arith.constant 0 : index
    %189 = vector.load %arg4[%c0_51, %c0_52] : memref<3x8xf32, #tpu.memory_space<vmem>>, vector<3x8xf32>
    tpu.vector_store %arg4[%c0_51, %c0_52], %188 {strides = array<i32>} : memref<3x8xf32, #tpu.memory_space<vmem>>, vector<3x8xf32>,
    return
  }
  func.func @transform_0(%arg0: i32) -> (i32, i32) {
    %c0_i32 = arith.constant 0 : i32
    %c0_i32_0 = arith.constant 0 : i32
    return %c0_i32, %arg0 : i32, i32
  }
  func.func @transform_1(%arg0: i32) -> (i32, i32) {
    %c0_i32 = arith.constant 0 : i32
    %c0_i32_0 = arith.constant 0 : i32
    %c0_i32_1 = arith.constant 0 : i32
    return %c0_i32, %c0_i32_0 : i32, i32
  }
  func.func @transform_2(%arg0: i32) -> (i32, i32) {
    %c0_i32 = arith.constant 0 : i32
    %c0_i32_0 = arith.constant 0 : i32
    %c0_i32_1 = arith.constant 0 : i32
    return %c0_i32, %c0_i32_0 : i32, i32
  }
  func.func @transform_3(%arg0: i32) -> (i32, i32) {
    %c0_i32 = arith.constant 0 : i32
    %c0_i32_0 = arith.constant 0 : i32
    return %c0_i32, %arg0 : i32, i32
  }
}

</mosaic_0001>

<llo_original>
// kernel: learned_ray_forward.1
$region0: #{learned_ray_forward.1}
  #allocation0 [shape = 'u32[]', space=smem, size = 0x4, offset = 0x4, fixed_abs, tag = 'smem constant byte address 0x4 - core index']
  #allocation1 [shape = 'u32[144,128]{1,0:T(1,128)}', space=vmem, size = 0x12000, scoped, tag = 'internal scratch']
  %s0 = inlined_call_operand.vmem [shape: f32[2,8], index: 0, kind: input, shape index: {}]
  %s1 = inlined_call_operand.vmem [shape: f32[32,256], index: 1, kind: input, shape index: {}]
  %s2 = inlined_call_operand.vmem [shape: f32[104,32], index: 2, kind: input, shape index: {}]
  %s3 = inlined_call_operand.hbm [shape: f32[3,8], index: 3, kind: output, shape index: {}]
  %s4 = sld [smem:[#allocation0]]
  $region22: #{learned_ray_forward.1} parent=0
    _
  %s6 = ssub.s32 1, %s4
  %s7 = scalar_select 0, %s6, %s4
  $region1: #{learned_ray_forward.1} parent=0
    #allocation2 [shape = 'u8[2048]{0}', space=vmem, size = 0x800, scoped, tag = 'output window, operand 0, single buffered']
    #allocation3 [shape = 's32[1]{0}', space=sflag, size = 0x4, scoped, tag = 'scoped memory for learned_ray_forward.1']
    %8 = vsyncpa [#allocation3], 0
    // Predicated region
    $region2: #{learned_ray_forward.1} parent=1 // pred_check
      _
    $region3: #{learned_ray_forward.1} parent=1 // pred_check_branch
      %10 = sbr.rel (0) target = $region5
    $region4: #{learned_ray_forward.1} parent=1 // pred_region
      _
    $region5: #{learned_ray_forward.1} parent=1 // pred_fallthru
      _
    // Predicated region
    $region6: #{learned_ray_forward.1} parent=1 // pred_check
      _
    $region7: #{learned_ray_forward.1} parent=1 // pred_check_branch
      %12 = sbr.rel (0) target = $region9
    $region8: #{learned_ray_forward.1} parent=1 // pred_region
      _
    $region9: #{learned_ray_forward.1} parent=1 // pred_fallthru
      _
    // Predicated region
    $region10: #{learned_ray_forward.1} parent=1 // pred_check
      _
    $region11: #{learned_ray_forward.1} parent=1 // pred_check_branch
      %14 = sbr.rel (0) target = $region13
    $region12: #{learned_ray_forward.1} parent=1 // pred_region
      _
    $region13: #{learned_ray_forward.1} parent=1 // pred_fallthru
      _
    %v15 = vld [vmem:[%s0] sm:$0x1]
    %v16 = vld [vmem:[%s0 + $0x1] sm:$0x1]
    %vm17 = vweird.f32 %v15
    %vm18 = vmxor %vm17, 1
    %vm19 = vweird.f32 %v16
    %vm20 = vmxor %vm19, 1
    %vm21 = vmand %vm18, %vm20
    %v22 = vsel %vm21, 1, 0
    %v23 = vcvt.s32.f32 %v22
    %v24 = vsel %vm18, %v15, 0.0
    %v25 = vmul.f32 %v24, 2.387324
    %v26 = vsel %vm20, %v16, 0.0
    %v27 = vmul.f32 %v26, 4.774648
    %v28 = vfloor.f32 %v25
    %v29 = vfloor.f32 %v27
    %v30 = vsub.f32 %v25, %v28
    %v31 = vsub.f32 %v27, %v29
    %v32 = vmax.f32 %v28, 0.0
    %v33 = vmin.f32 %v32, 15.0
    %v34 = vmax.f32 %v29, 0.0
    %v35 = vmin.f32 %v34, 15.0
    %v36 = vcvt.f32.s32.to.zero.pseudo %v33
    %v37 = vadd.f32 %v33, 1.0
    %v38 = vmax.f32 %v37, 0.0
    %v39 = vmin.f32 %v38, 15.0
    %v40 = vcvt.f32.s32.to.zero.pseudo %v39
    %v41 = vcvt.f32.s32.to.zero.pseudo %v35
    %v42 = vadd.f32 %v35, 1.0
    %v43 = vmax.f32 %v42, 0.0
    %v44 = vmin.f32 %v43, 15.0
    %v45 = vcvt.f32.s32.to.zero.pseudo %v44
    %v46 = vlaneseq
    %v47 = vshrl.u32 %v46, 7
    %v48 = vadd.s32 %v47, 8
    %v49 = vlaneseq
    %v50 = vshrl.u32 %v49, 7
    %v51 = vsub.s32 0, %v50
    %v52 = vrot.slane %v41, %v51
    %vm53 = vcmp.eq.s32.totalorder %v47, %v52
    %vm54 = vcmp.eq.s32.totalorder %v48, %v52
    %v55 = vsub.f32 1.0, %v31
    %v56 = vlaneseq
    %v57 = vshrl.u32 %v56, 7
    %v58 = vsub.s32 0, %v57
    %v59 = vrot.slane %v55, %v58
    %v60 = vsel %vm53, %v59, 0.0
    %v61 = vsel %vm54, %v59, 0.0
    %v62 = vlaneseq
    %v63 = vshrl.u32 %v62, 7
    %v64 = vsub.s32 0, %v63
    %v65 = vrot.slane %v45, %v64
    %vm66 = vcmp.eq.s32.totalorder %v47, %v65
    %vm67 = vcmp.eq.s32.totalorder %v48, %v65
    %v68 = vlaneseq
    %v69 = vshrl.u32 %v68, 7
    %v70 = vsub.s32 0, %v69
    %v71 = vrot.slane %v31, %v70
    %v72 = vsel %vm66, %v71, 0.0
    %v73 = vsel %vm67, %v71, 0.0
    %v74 = vadd.f32 %v60, %v72
    %v75 = vadd.f32 %v61, %v73
    %v76 = vlaneseq
    %v77 = vshrl.u32 %v76, 7
    %v78 = vsub.s32 0, %v77
    %v79 = vrot.slane %v23, %v78
    %v80 = vmul.f32 %v74, %v79
    %v81 = vmul.f32 %v75, %v79
    %v82 = vlaneseq
    %v83 = vshrl.u32 %v82, 7
    %v84 = vsub.s32 0, %v83
    %v85 = vrot.slane %v36, %v84
    %vm86 = vcmp.eq.s32.totalorder %v47, %v85
    %vm87 = vcmp.eq.s32.totalorder %v48, %v85
    %v88 = vsub.f32 1.0, %v30
    %v89 = vlaneseq
    %v90 = vshrl.u32 %v89, 7
    %v91 = vsub.s32 0, %v90
    %v92 = vrot.slane %v88, %v91
    %v93 = vsel %vm86, %v92, 0.0
    %v94 = vsel %vm87, %v92, 0.0
    %v95 = vlaneseq
    %v96 = vshrl.u32 %v95, 7
    %v97 = vsub.s32 0, %v96
    %v98 = vrot.slane %v40, %v97
    %vm99 = vcmp.eq.s32.totalorder %v47, %v98
    %vm100 = vcmp.eq.s32.totalorder %v48, %v98
    %v101 = vlaneseq
    %v102 = vshrl.u32 %v101, 7
    %v103 = vsub.s32 0, %v102
    %v104 = vrot.slane %v30, %v103
    %v105 = vsel %vm99, %v104, 0.0
    %v106 = vsel %vm100, %v104, 0.0
    %v107 = vadd.f32 %v93, %v105
    %v108 = vadd.f32 %v94, %v106
    %v111 = vcombine.high %v80, %v80
    %v113 = vunpack.c.l.s4 1966171168
    %v114 = vunpack.c.0.s8 %v113
    %v115 = vlaneseq
    %v116 = vshrl.u32 %v115, 7
    %v117 = vsub.s32 %v114, %v116
    %v118 = vrot.slane %v80, %v117
    %v120 = vunpack.c.l.s4 1966171168
    %v121 = vunpack.c.0.s8 %v120
    %v122 = vlaneseq
    %v123 = vshrl.u32 %v122, 7
    %v124 = vsub.s32 %v121, %v123
    %v125 = vrot.slane %v111, %v124
    %v126 = vcombine.high %v118, %v118
    %v127 = vcombine.high %v125, %v125
    %v129 = vunpack.c.l.s4 1966171168
    %v130 = vunpack.c.0.s8 %v129
    %v131 = vlaneseq
    %v132 = vshrl.u32 %v131, 7
    %v133 = vsub.s32 %v130, %v132
    %v134 = vrot.slane %v118, %v133
    %v136 = vunpack.c.l.s4 1966171168
    %v137 = vunpack.c.0.s8 %v136
    %v138 = vlaneseq
    %v139 = vshrl.u32 %v138, 7
    %v140 = vsub.s32 %v137, %v139
    %v141 = vrot.slane %v125, %v140
    %v143 = vunpack.c.l.s4 1966171168
    %v144 = vunpack.c.0.s8 %v143
    %v145 = vlaneseq
    %v146 = vshrl.u32 %v145, 7
    %v147 = vsub.s32 %v144, %v146
    %v148 = vrot.slane %v126, %v147
    %v150 = vunpack.c.l.s4 1966171168
    %v151 = vunpack.c.0.s8 %v150
    %v152 = vlaneseq
    %v153 = vshrl.u32 %v152, 7
    %v154 = vsub.s32 %v151, %v153
    %v155 = vrot.slane %v127, %v154
    %v156 = vcombine.high %v134, %v134
    %v157 = vcombine.high %v141, %v141
    %v158 = vcombine.high %v148, %v148
    %v159 = vcombine.high %v155, %v155
    %v160 = vcombine.high %v81, %v81
    %v162 = vunpack.c.l.s4 1966171168
    %v163 = vunpack.c.0.s8 %v162
    %v164 = vlaneseq
    %v165 = vshrl.u32 %v164, 7
    %v166 = vsub.s32 %v163, %v165
    %v167 = vrot.slane %v81, %v166
    %v169 = vunpack.c.l.s4 1966171168
    %v170 = vunpack.c.0.s8 %v169
    %v171 = vlaneseq
    %v172 = vshrl.u32 %v171, 7
    %v173 = vsub.s32 %v170, %v172
    %v174 = vrot.slane %v160, %v173
    %v175 = vcombine.high %v167, %v167
    %v176 = vcombine.high %v174, %v174
    %v178 = vunpack.c.l.s4 1966171168
    %v179 = vunpack.c.0.s8 %v178
    %v180 = vlaneseq
    %v181 = vshrl.u32 %v180, 7
    %v182 = vsub.s32 %v179, %v181
    %v183 = vrot.slane %v167, %v182
    %v185 = vunpack.c.l.s4 1966171168
    %v186 = vunpack.c.0.s8 %v185
    %v187 = vlaneseq
    %v188 = vshrl.u32 %v187, 7
    %v189 = vsub.s32 %v186, %v188
    %v190 = vrot.slane %v174, %v189
    %v192 = vunpack.c.l.s4 1966171168
    %v193 = vunpack.c.0.s8 %v192
    %v194 = vlaneseq
    %v195 = vshrl.u32 %v194, 7
    %v196 = vsub.s32 %v193, %v195
    %v197 = vrot.slane %v175, %v196
    %v199 = vunpack.c.l.s4 1966171168
    %v200 = vunpack.c.0.s8 %v199
    %v201 = vlaneseq
    %v202 = vshrl.u32 %v201, 7
    %v203 = vsub.s32 %v200, %v202
    %v204 = vrot.slane %v176, %v203
    %v205 = vcombine.high %v183, %v183
    %v206 = vcombine.high %v190, %v190
    %v207 = vcombine.high %v197, %v197
    %v208 = vcombine.high %v204, %v204
    %v209 = vlaneseq
    %v210 = vshrl.u32 %v209, 7
    %v211 = vsub.s32 0, %v210
    %v212 = vrot.slane %v134, %v211
    %v213 = vlaneseq
    %v214 = vshrl.u32 %v213, 7
    %v215 = vsub.s32 0, %v214
    %v216 = vrot.slane %v148, %v215
    %v217 = vlaneseq
    %v218 = vshrl.u32 %v217, 7
    %v219 = vsub.s32 0, %v218
    %v220 = vrot.slane %v156, %v219
    %v221 = vlaneseq
    %v222 = vshrl.u32 %v221, 7
    %v223 = vsub.s32 0, %v222
    %v224 = vrot.slane %v158, %v223
    %v225 = vlaneseq
    %v226 = vshrl.u32 %v225, 7
    %v227 = vsub.s32 0, %v226
    %v228 = vrot.slane %v141, %v227
    %v229 = vlaneseq
    %v230 = vshrl.u32 %v229, 7
    %v231 = vsub.s32 0, %v230
    %v232 = vrot.slane %v155, %v231
    %v233 = vlaneseq
    %v234 = vshrl.u32 %v233, 7
    %v235 = vsub.s32 0, %v234
    %v236 = vrot.slane %v157, %v235
    %v237 = vlaneseq
    %v238 = vshrl.u32 %v237, 7
    %v239 = vsub.s32 0, %v238
    %v240 = vrot.slane %v159, %v239
    %v241 = vlaneseq
    %v242 = vshrl.u32 %v241, 7
    %v243 = vsub.s32 0, %v242
    %v244 = vrot.slane %v183, %v243
    %v245 = vlaneseq
    %v246 = vshrl.u32 %v245, 7
    %v247 = vsub.s32 0, %v246
    %v248 = vrot.slane %v197, %v247
    %v249 = vlaneseq
    %v250 = vshrl.u32 %v249, 7
    %v251 = vsub.s32 0, %v250
    %v252 = vrot.slane %v205, %v251
    %v253 = vlaneseq
    %v254 = vshrl.u32 %v253, 7
    %v255 = vsub.s32 0, %v254
    %v256 = vrot.slane %v207, %v255
    %v257 = vlaneseq
    %v258 = vshrl.u32 %v257, 7
    %v259 = vsub.s32 0, %v258
    %v260 = vrot.slane %v190, %v259
    %v261 = vlaneseq
    %v262 = vshrl.u32 %v261, 7
    %v263 = vsub.s32 0, %v262
    %v264 = vrot.slane %v204, %v263
    %v265 = vlaneseq
    %v266 = vshrl.u32 %v265, 7
    %v267 = vsub.s32 0, %v266
    %v268 = vrot.slane %v206, %v267
    %v269 = vlaneseq
    %v270 = vshrl.u32 %v269, 7
    %v271 = vsub.s32 0, %v270
    %v272 = vrot.slane %v208, %v271
    %v289 = vmul.f32 %v212, %v107
    %v290 = vmul.f32 %v212, %v108
    %v291 = vmul.f32 %v216, %v107
    %v292 = vmul.f32 %v216, %v108
    %v293 = vmul.f32 %v220, %v107
    %v294 = vmul.f32 %v220, %v108
    %v295 = vmul.f32 %v224, %v107
    %v296 = vmul.f32 %v224, %v108
    %v297 = vmul.f32 %v228, %v107
    %v298 = vmul.f32 %v228, %v108
    %v299 = vmul.f32 %v232, %v107
    %v300 = vmul.f32 %v232, %v108
    %v301 = vmul.f32 %v236, %v107
    %v302 = vmul.f32 %v236, %v108
    %v303 = vmul.f32 %v240, %v107
    %v304 = vmul.f32 %v240, %v108
    %v305 = vmul.f32 %v244, %v107
    %v306 = vmul.f32 %v244, %v108
    %v307 = vmul.f32 %v248, %v107
    %v308 = vmul.f32 %v248, %v108
    %v309 = vmul.f32 %v252, %v107
    %v310 = vmul.f32 %v252, %v108
    %v311 = vmul.f32 %v256, %v107
    %v312 = vmul.f32 %v256, %v108
    %v313 = vmul.f32 %v260, %v107
    %v314 = vmul.f32 %v260, %v108
    %v315 = vmul.f32 %v264, %v107
    %v316 = vmul.f32 %v264, %v108
    %v317 = vmul.f32 %v268, %v107
    %v318 = vmul.f32 %v268, %v108
    %v319 = vmul.f32 %v272, %v107
    %v320 = vmul.f32 %v272, %v108
    %v321 = vld [vmem:[%s1] sm:$0xff]
    %v322 = vld [vmem:[%s1 + $0x8] sm:$0xff]
    %v323 = vld [vmem:[%s1 + $0x10] sm:$0xff]
    %v324 = vld [vmem:[%s1 + $0x18] sm:$0xff]
    %v325 = vld [vmem:[%s1 + $0x20] sm:$0xff]
    %v326 = vld [vmem:[%s1 + $0x28] sm:$0xff]
    %v327 = vld [vmem:[%s1 + $0x30] sm:$0xff]
    %v328 = vld [vmem:[%s1 + $0x38] sm:$0xff]
    %v329 = vld [vmem:[%s2] sm:$0xff]
    %v330 = vld [vmem:[%s2 + $0x8] sm:$0xff]
    %v331 = vld [vmem:[%s2 + $0x10] sm:$0xff]
    %v332 = vld [vmem:[%s2 + $0x18] sm:$0xff]
    %v333 = vld [vmem:[%s2 + $0x20] sm:$0xff]
    %v334 = vld [vmem:[%s2 + $0x28] sm:$0xff]
    %v335 = vld [vmem:[%s2 + $0x30] sm:$0xff]
    %v336 = vld [vmem:[%s2 + $0x38] sm:$0xff]
    %v337 = vld [vmem:[%s2 + $0x40] sm:$0xff]
    %v338 = vld [vmem:[%s2 + $0x48] sm:$0xff]
    %v339 = vld [vmem:[%s2 + $0x50] sm:$0xff]
    %v340 = vld [vmem:[%s2 + $0x58] sm:$0xff]
    %v341 = vld [vmem:[%s2 + $0x60] sm:$0xff]
    %343 = vset.pattern.permute.xlu0 0
    %344 = vperm.xlu0 %343, %v338
    %v345 = vpop.permute.xlu0 %344
    %348 = vset.pattern.permute.xlu0 0
    %349 = vperm.xlu0 %348, %v339
    %v350 = vpop.permute.xlu0 %349
    %353 = vset.pattern.permute.xlu0 0
    %354 = vperm.xlu0 %353, %v340
    %v355 = vpop.permute.xlu0 %354
    %358 = vset.pattern.permute.xlu0 0
    %359 = vperm.xlu0 %358, %v341
    %v360 = vpop.permute.xlu0 %359
    %362 = vmatprep.subr.mxu0 0.0
    %363 = vmatpush1.msra.mxu0 %v304
    %364 = vmatprep.subr.mxu0 0.0
    %365 = vmatpush1.msra.mxu0 %v303
    %366 = vmatprep.subr.mxu0 0.0
    %367 = vmatpush1.msra.mxu0 %v302
    %368 = vmatprep.subr.mxu0 0.0
    %369 = vmatpush1.msra.mxu0 %v301
    %370 = vmatprep.subr.mxu0 0.0
    %371 = vmatpush1.msra.mxu0 %v300
    %372 = vmatprep.subr.mxu0 0.0
    %373 = vmatpush1.msra.mxu0 %v299
    %374 = vmatprep.subr.mxu0 0.0
    %375 = vmatpush1.msra.mxu0 %v298
    %376 = vmatprep.subr.mxu0 0.0
    %377 = vmatpush1.msra.mxu0 %v297
    %378 = vmatprep.subr.mxu0 0.0
    %379 = vmatpush1.msra.mxu0 %v296
    %380 = vmatprep.subr.mxu0 0.0
    %381 = vmatpush1.msra.mxu0 %v295
    %382 = vmatprep.subr.mxu0 0.0
    %383 = vmatpush1.msra.mxu0 %v294
    %384 = vmatprep.subr.mxu0 0.0
    %385 = vmatpush1.msra.mxu0 %v293
    %386 = vmatprep.subr.mxu0 0.0
    %387 = vmatpush1.msra.mxu0 %v292
    %388 = vmatprep.subr.mxu0 0.0
    %389 = vmatpush1.msra.mxu0 %v291
    %390 = vmatprep.subr.mxu0 0.0
    %391 = vmatpush1.msra.mxu0 %v290
    %392 = vmatprep.subr.mxu0 0.0
    %393 = vmatpush1.msra.mxu0 %v289
    %394 = vmatprep.subr.mxu0 0.0
    %395 = vmatpush2.msra.mxu0 %v320
    %396 = vmatprep.subr.mxu0 0.0
    %397 = vmatpush2.msra.mxu0 %v319
    %398 = vmatprep.subr.mxu0 0.0
    %399 = vmatpush2.msra.mxu0 %v318
    %400 = vmatprep.subr.mxu0 0.0
    %401 = vmatpush2.msra.mxu0 %v317
    %402 = vmatprep.subr.mxu0 0.0
    %403 = vmatpush2.msra.mxu0 %v316
    %404 = vmatprep.subr.mxu0 0.0
    %405 = vmatpush2.msra.mxu0 %v315
    %406 = vmatprep.subr.mxu0 0.0
    %407 = vmatpush2.msra.mxu0 %v314
    %408 = vmatprep.subr.mxu0 0.0
    %409 = vmatpush2.msra.mxu0 %v313
    %410 = vmatprep.subr.mxu0 0.0
    %411 = vmatpush2.msra.mxu0 %v312
    %412 = vmatprep.subr.mxu0 0.0
    %413 = vmatpush2.msra.mxu0 %v311
    %414 = vmatprep.subr.mxu0 0.0
    %415 = vmatpush2.msra.mxu0 %v310
    %416 = vmatprep.subr.mxu0 0.0
    %417 = vmatpush2.msra.mxu0 %v309
    %418 = vmatprep.subr.mxu0 0.0
    %419 = vmatpush2.msra.mxu0 %v308
    %420 = vmatprep.subr.mxu0 0.0
    %421 = vmatpush2.msra.mxu0 %v307
    %422 = vmatprep.subr.mxu0 0.0
    %423 = vmatpush2.msra.mxu0 %v306
    %424 = vmatprep.subr.mxu0 0.0
    %425 = vmatpush2.msra.mxu0 %v305
    %426 = vmatprep.mubr.f32.mxu0 %v322
    %427 = vmatmul.mubr.f32.gmra.mxu0 %v321
    %v428 = vpop.f32.mrf.mxu0
    %v429 = vadd.f32 %v345, %v428
    %v430 = vpop.f32.mrf.mxu0
    %431 = vmatprep.mubr.f32.mxu0 %v324
    %432 = vmatmul.mubr.f32.gmra.mxu0 %v323
    %v433 = vpop.f32.mrf.mxu0
    %v434 = vadd.f32 %v350, %v433
    %v435 = vpop.f32.mrf.mxu0
    %436 = vmatprep.mubr.f32.mxu0 %v326
    %437 = vmatmul.mubr.f32.gmra.mxu0 %v325
    %v438 = vpop.f32.mrf.mxu0
    %v439 = vadd.f32 %v355, %v438
    %v440 = vpop.f32.mrf.mxu0
    %441 = vmatprep.mubr.f32.mxu0 %v328
    %442 = vmatmul.mubr.f32.gmra.mxu0 %v327
    %v443 = vpop.f32.mrf.mxu0
    %v444 = vadd.f32 %v360, %v443
    %v445 = vpop.f32.mrf.mxu0
    %446 = vdwg.mxu0
    %vm447 = vcmask 64512
    %v448 = vsel %vm447, %v429, 0.0
    %v449 = vsel %vm447, %v434, 0.0
    %v450 = vadd.f32 %v448, %v449
    %v451 = vsel %vm447, %v439, 0.0
    %v452 = vadd.f32 %v450, %v451
    %v453 = vsel %vm447, %v444, 0.0
    %v454 = vadd.f32 %v452, %v453
    %v455 = vrot.slane %v454, 4
    %v456 = vadd.f32 %v454, %v455
    %v457 = vrot.slane %v456, 2
    %v458 = vadd.f32 %v456, %v457
    %v459 = vrot.slane %v458, 1
    %v460 = vadd.f32 %v458, %v459
    %v461 = vrcp.pop 32.0
    %v462 = vmul.f32 %v460, %v461
    %v463 = vsub.f32 %v429, %v462
    %v464 = vsub.f32 %v434, %v462
    %v465 = vsub.f32 %v439, %v462
    %v466 = vsub.f32 %v444, %v462
    %v467 = vmul.f32 %v463, %v463
    %v468 = vmul.f32 %v464, %v464
    %v469 = vmul.f32 %v465, %v465
    %v470 = vmul.f32 %v466, %v466
    %v471 = vsel %vm447, %v467, 0.0
    %v472 = vsel %vm447, %v468, 0.0
    %v473 = vadd.f32 %v471, %v472
    %v474 = vsel %vm447, %v469, 0.0
    %v475 = vadd.f32 %v473, %v474
    %v476 = vsel %vm447, %v470, 0.0
    %v477 = vadd.f32 %v475, %v476
    %v478 = vrot.slane %v477, 4
    %v479 = vadd.f32 %v477, %v478
    %v480 = vrot.slane %v479, 2
    %v481 = vadd.f32 %v479, %v480
    %v482 = vrot.slane %v481, 1
    %v483 = vadd.f32 %v481, %v482
    %v484 = vmul.f32 %v483, %v461
    %v485 = vadd.f32 %v484, 1e-05
    %v486 = vrsqrt.pop %v485
    %v487 = vmul.f32 %v463, %v486
    %v488 = vmul.f32 %v464, %v486
    %v489 = vmul.f32 %v465, %v486
    %v490 = vmul.f32 %v466, %v486
    %491 = vset.pattern.permute.xlu0 1
    %492 = vperm.xlu0 %491, %v338
    %v493 = vpop.permute.xlu0 %492
    %495 = vset.pattern.permute.xlu0 1
    %496 = vperm.xlu0 %495, %v339
    %v497 = vpop.permute.xlu0 %496
    %499 = vset.pattern.permute.xlu0 1
    %500 = vperm.xlu0 %499, %v340
    %v501 = vpop.permute.xlu0 %500
    %503 = vset.pattern.permute.xlu0 1
    %504 = vperm.xlu0 %503, %v341
    %v505 = vpop.permute.xlu0 %504
    %v507 = vmul.f32 %v487, %v493
    %v508 = vmul.f32 %v488, %v497
    %v509 = vmul.f32 %v489, %v501
    %v510 = vmul.f32 %v490, %v505
    %511 = vset.pattern.permute.xlu0 2
    %512 = vperm.xlu0 %511, %v338
    %v513 = vpop.permute.xlu0 %512
    %515 = vset.pattern.permute.xlu0 2
    %516 = vperm.xlu0 %515, %v339
    %v517 = vpop.permute.xlu0 %516
    %519 = vset.pattern.permute.xlu0 2
    %520 = vperm.xlu0 %519, %v340
    %v521 = vpop.permute.xlu0 %520
    %523 = vset.pattern.permute.xlu0 2
    %524 = vperm.xlu0 %523, %v341
    %v525 = vpop.permute.xlu0 %524
    %v527 = vadd.f32 %v507, %v513
    %v528 = vadd.f32 %v508, %v517
    %v529 = vadd.f32 %v509, %v521
    %v530 = vadd.f32 %v510, %v525
    %v531 = vmax.f32 %v527, 0.0
    %v532 = vmax.f32 %v528, 0.0
    %v533 = vmax.f32 %v529, 0.0
    %v534 = vmax.f32 %v530, 0.0
    %535 = vset.pattern.permute.xlu0 3
    %536 = vperm.xlu0 %535, %v338
    %v537 = vpop.permute.xlu0 %536
    %539 = vset.pattern.permute.xlu0 3
    %540 = vperm.xlu0 %539, %v339
    %v541 = vpop.permute.xlu0 %540
    %543 = vset.pattern.permute.xlu0 3
    %544 = vperm.xlu0 %543, %v340
    %v545 = vpop.permute.xlu0 %544
    %547 = vset.pattern.permute.xlu0 3
    %548 = vperm.xlu0 %547, %v341
    %v549 = vpop.permute.xlu0 %548
    %vm551 = vcmask 261120
    %v553 = vsel %vm551, %v329, 0
    %v556 = vsel %vm551, %v330, 0
    %v559 = vsel %vm551, %v331, 0
    %v562 = vsel %vm551, %v332, 0
    %564 = vmatprep.subr.mxu0 0.0
    %565 = vmatpush1.msra.mxu0 0.0
    %566 = vmatprep.subr.mxu0 0.0
    %567 = vmatpush1.msra.mxu0 0.0
    %568 = vmatprep.subr.mxu0 0.0
    %569 = vmatpush1.msra.mxu0 0.0
    %570 = vmatprep.subr.mxu0 0.0
    %571 = vmatpush1.msra.mxu0 0.0
    %572 = vmatprep.subr.mxu0 0.0
    %573 = vmatpush1.msra.mxu0 0.0
    %574 = vmatprep.subr.mxu0 0.0
    %575 = vmatpush1.msra.mxu0 0.0
    %576 = vmatprep.subr.mxu0 0.0
    %577 = vmatpush1.msra.mxu0 0.0
    %578 = vmatprep.subr.mxu0 0.0
    %579 = vmatpush1.msra.mxu0 0.0
    %580 = vmatprep.subr.mxu0 0.0
    %581 = vmatpush1.msra.mxu0 0.0
    %582 = vmatprep.subr.mxu0 0.0
    %583 = vmatpush1.msra.mxu0 0.0
    %584 = vmatprep.subr.mxu0 0.0
    %585 = vmatpush1.msra.mxu0 0.0
    %586 = vmatprep.subr.mxu0 0.0
    %587 = vmatpush1.msra.mxu0 0.0
    %588 = vmatprep.subr.mxu0 0.0
    %589 = vmatpush1.msra.mxu0 %v534
    %590 = vmatprep.subr.mxu0 0.0
    %591 = vmatpush1.msra.mxu0 %v533
    %592 = vmatprep.subr.mxu0 0.0
    %593 = vmatpush1.msra.mxu0 %v532
    %594 = vmatprep.subr.mxu0 0.0
    %595 = vmatpush1.msra.mxu0 %v531
    %596 = vmatprep.subr.mxu0 0.0
    %597 = vmatpush2.msra.mxu0 0.0
    %598 = vmatprep.subr.mxu0 0.0
    %599 = vmatpush2.msra.mxu0 0.0
    %600 = vmatprep.subr.mxu0 0.0
    %601 = vmatpush2.msra.mxu0 0.0
    %602 = vmatprep.subr.mxu0 0.0
    %603 = vmatpush2.msra.mxu0 0.0
    %604 = vmatprep.subr.mxu0 0.0
    %605 = vmatpush2.msra.mxu0 0.0
    %606 = vmatprep.subr.mxu0 0.0
    %607 = vmatpush2.msra.mxu0 0.0
    %608 = vmatprep.subr.mxu0 0.0
    %609 = vmatpush2.msra.mxu0 0.0
    %610 = vmatprep.subr.mxu0 0.0
    %611 = vmatpush2.msra.mxu0 0.0
    %612 = vmatprep.subr.mxu0 0.0
    %613 = vmatpush2.msra.mxu0 0.0
    %614 = vmatprep.subr.mxu0 0.0
    %615 = vmatpush2.msra.mxu0 0.0
    %616 = vmatprep.subr.mxu0 0.0
    %617 = vmatpush2.msra.mxu0 0.0
    %618 = vmatprep.subr.mxu0 0.0
    %619 = vmatpush2.msra.mxu0 0.0
    %620 = vmatprep.subr.mxu0 0.0
    %621 = vmatpush2.msra.mxu0 0.0
    %622 = vmatprep.subr.mxu0 0.0
    %623 = vmatpush2.msra.mxu0 0.0
    %624 = vmatprep.subr.mxu0 0.0
    %625 = vmatpush2.msra.mxu0 0.0
    %626 = vmatprep.subr.mxu0 0.0
    %627 = vmatpush2.msra.mxu0 0.0
    %628 = vmatprep.mubr.f32.mxu0 0.0
    %629 = vmatmul.mubr.f32.gmra.mxu0 %v553
    %v630 = vpop.f32.mrf.mxu0
    %v631 = vadd.f32 %v537, %v630
    %v632 = vpop.f32.mrf.mxu0
    %633 = vmatprep.mubr.f32.mxu0 0.0
    %634 = vmatmul.mubr.f32.gmra.mxu0 %v556
    %v635 = vpop.f32.mrf.mxu0
    %v636 = vadd.f32 %v541, %v635
    %v637 = vpop.f32.mrf.mxu0
    %638 = vmatprep.mubr.f32.mxu0 0.0
    %639 = vmatmul.mubr.f32.gmra.mxu0 %v559
    %v640 = vpop.f32.mrf.mxu0
    %v641 = vadd.f32 %v545, %v640
    %v642 = vpop.f32.mrf.mxu0
    %643 = vmatprep.mubr.f32.mxu0 0.0
    %644 = vmatmul.mubr.f32.gmra.mxu0 %v562
    %v645 = vpop.f32.mrf.mxu0
    %v646 = vadd.f32 %v549, %v645
    %v647 = vpop.f32.mrf.mxu0
    %648 = vdwg.mxu0
    %v649 = vsel %vm447, %v631, 0.0
    %v650 = vsel %vm447, %v636, 0.0
    %v651 = vadd.f32 %v649, %v650
    %v652 = vsel %vm447, %v641, 0.0
    %v653 = vadd.f32 %v651, %v652
    %v654 = vsel %vm447, %v646, 0.0
    %v655 = vadd.f32 %v653, %v654
    %v656 = vrot.slane %v655, 4
    %v657 = vadd.f32 %v655, %v656
    %v658 = vrot.slane %v657, 2
    %v659 = vadd.f32 %v657, %v658
    %v660 = vrot.slane %v659, 1
    %v661 = vadd.f32 %v659, %v660
    %v662 = vmul.f32 %v661, %v461
    %v663 = vsub.f32 %v631, %v662
    %v664 = vsub.f32 %v636, %v662
    %v665 = vsub.f32 %v641, %v662
    %v666 = vsub.f32 %v646, %v662
    %v667 = vmul.f32 %v663, %v663
    %v668 = vmul.f32 %v664, %v664
    %v669 = vmul.f32 %v665, %v665
    %v670 = vmul.f32 %v666, %v666
    %v671 = vsel %vm447, %v667, 0.0
    %v672 = vsel %vm447, %v668, 0.0
    %v673 = vadd.f32 %v671, %v672
    %v674 = vsel %vm447, %v669, 0.0
    %v675 = vadd.f32 %v673, %v674
    %v676 = vsel %vm447, %v670, 0.0
    %v677 = vadd.f32 %v675, %v676
    %v678 = vrot.slane %v677, 4
    %v679 = vadd.f32 %v677, %v678
    %v680 = vrot.slane %v679, 2
    %v681 = vadd.f32 %v679, %v680
    %v682 = vrot.slane %v681, 1
    %v683 = vadd.f32 %v681, %v682
    %v684 = vmul.f32 %v683, %v461
    %v685 = vadd.f32 %v684, 1e-05
    %v686 = vrsqrt.pop %v685
    %v687 = vmul.f32 %v663, %v686
    %v688 = vmul.f32 %v664, %v686
    %v689 = vmul.f32 %v665, %v686
    %v690 = vmul.f32 %v666, %v686
    %691 = vset.pattern.permute.xlu0 4
    %692 = vperm.xlu0 %691, %v338
    %v693 = vpop.permute.xlu0 %692
    %695 = vset.pattern.permute.xlu0 4
    %696 = vperm.xlu0 %695, %v339
    %v697 = vpop.permute.xlu0 %696
    %699 = vset.pattern.permute.xlu0 4
    %700 = vperm.xlu0 %699, %v340
    %v701 = vpop.permute.xlu0 %700
    %703 = vset.pattern.permute.xlu0 4
    %704 = vperm.xlu0 %703, %v341
    %v705 = vpop.permute.xlu0 %704
    %v707 = vmul.f32 %v687, %v693
    %v708 = vmul.f32 %v688, %v697
    %v709 = vmul.f32 %v689, %v701
    %v710 = vmul.f32 %v690, %v705
    %711 = vset.pattern.permute.xlu0 5
    %712 = vperm.xlu0 %711, %v338
    %v713 = vpop.permute.xlu0 %712
    %715 = vset.pattern.permute.xlu0 5
    %716 = vperm.xlu0 %715, %v339
    %v717 = vpop.permute.xlu0 %716
    %719 = vset.pattern.permute.xlu0 5
    %720 = vperm.xlu0 %719, %v340
    %v721 = vpop.permute.xlu0 %720
    %723 = vset.pattern.permute.xlu0 5
    %724 = vperm.xlu0 %723, %v341
    %v725 = vpop.permute.xlu0 %724
    %v727 = vadd.f32 %v707, %v713
    %v728 = vadd.f32 %v708, %v717
    %v729 = vadd.f32 %v709, %v721
    %v730 = vadd.f32 %v710, %v725
    %v731 = vmax.f32 %v727, 0.0
    %v732 = vmax.f32 %v728, 0.0
    %v733 = vmax.f32 %v729, 0.0
    %v734 = vmax.f32 %v730, 0.0
    %735 = vset.pattern.permute.xlu0 6
    %736 = vperm.xlu0 %735, %v338
    %v737 = vpop.permute.xlu0 %736
    %739 = vset.pattern.permute.xlu0 6
    %740 = vperm.xlu0 %739, %v339
    %v741 = vpop.permute.xlu0 %740
    %743 = vset.pattern.permute.xlu0 6
    %744 = vperm.xlu0 %743, %v340
    %v745 = vpop.permute.xlu0 %744
    %747 = vset.pattern.permute.xlu0 6
    %748 = vperm.xlu0 %747, %v341
    %v749 = vpop.permute.xlu0 %748
    %v752 = vsel %vm551, %v333, 0
    %v755 = vsel %vm551, %v334, 0
    %v758 = vsel %vm551, %v335, 0
    %v761 = vsel %vm551, %v336, 0
    %763 = vmatprep.subr.mxu0 0.0
    %764 = vmatpush1.msra.mxu0 0.0
    %765 = vmatprep.subr.mxu0 0.0
    %766 = vmatpush1.msra.mxu0 0.0
    %767 = vmatprep.subr.mxu0 0.0
    %768 = vmatpush1.msra.mxu0 0.0
    %769 = vmatprep.subr.mxu0 0.0
    %770 = vmatpush1.msra.mxu0 0.0
    %771 = vmatprep.subr.mxu0 0.0
    %772 = vmatpush1.msra.mxu0 0.0
    %773 = vmatprep.subr.mxu0 0.0
    %774 = vmatpush1.msra.mxu0 0.0
    %775 = vmatprep.subr.mxu0 0.0
    %776 = vmatpush1.msra.mxu0 0.0
    %777 = vmatprep.subr.mxu0 0.0
    %778 = vmatpush1.msra.mxu0 0.0
    %779 = vmatprep.subr.mxu0 0.0
    %780 = vmatpush1.msra.mxu0 0.0
    %781 = vmatprep.subr.mxu0 0.0
    %782 = vmatpush1.msra.mxu0 0.0
    %783 = vmatprep.subr.mxu0 0.0
    %784 = vmatpush1.msra.mxu0 0.0
    %785 = vmatprep.subr.mxu0 0.0
    %786 = vmatpush1.msra.mxu0 0.0
    %787 = vmatprep.subr.mxu0 0.0
    %788 = vmatpush1.msra.mxu0 %v734
    %789 = vmatprep.subr.mxu0 0.0
    %790 = vmatpush1.msra.mxu0 %v733
    %791 = vmatprep.subr.mxu0 0.0
    %792 = vmatpush1.msra.mxu0 %v732
    %793 = vmatprep.subr.mxu0 0.0
    %794 = vmatpush1.msra.mxu0 %v731
    %795 = vmatprep.subr.mxu0 0.0
    %796 = vmatpush2.msra.mxu0 0.0
    %797 = vmatprep.subr.mxu0 0.0
    %798 = vmatpush2.msra.mxu0 0.0
    %799 = vmatprep.subr.mxu0 0.0
    %800 = vmatpush2.msra.mxu0 0.0
    %801 = vmatprep.subr.mxu0 0.0
    %802 = vmatpush2.msra.mxu0 0.0
    %803 = vmatprep.subr.mxu0 0.0
    %804 = vmatpush2.msra.mxu0 0.0
    %805 = vmatprep.subr.mxu0 0.0
    %806 = vmatpush2.msra.mxu0 0.0
    %807 = vmatprep.subr.mxu0 0.0
    %808 = vmatpush2.msra.mxu0 0.0
    %809 = vmatprep.subr.mxu0 0.0
    %810 = vmatpush2.msra.mxu0 0.0
    %811 = vmatprep.subr.mxu0 0.0
    %812 = vmatpush2.msra.mxu0 0.0
    %813 = vmatprep.subr.mxu0 0.0
    %814 = vmatpush2.msra.mxu0 0.0
    %815 = vmatprep.subr.mxu0 0.0
    %816 = vmatpush2.msra.mxu0 0.0
    %817 = vmatprep.subr.mxu0 0.0
    %818 = vmatpush2.msra.mxu0 0.0
    %819 = vmatprep.subr.mxu0 0.0
    %820 = vmatpush2.msra.mxu0 0.0
    %821 = vmatprep.subr.mxu0 0.0
    %822 = vmatpush2.msra.mxu0 0.0
    %823 = vmatprep.subr.mxu0 0.0
    %824 = vmatpush2.msra.mxu0 0.0
    %825 = vmatprep.subr.mxu0 0.0
    %826 = vmatpush2.msra.mxu0 0.0
    %827 = vmatprep.mubr.f32.mxu0 0.0
    %828 = vmatmul.mubr.f32.gmra.mxu0 %v752
    %v829 = vpop.f32.mrf.mxu0
    %v830 = vadd.f32 %v737, %v829
    %v831 = vpop.f32.mrf.mxu0
    %832 = vmatprep.mubr.f32.mxu0 0.0
    %833 = vmatmul.mubr.f32.gmra.mxu0 %v755
    %v834 = vpop.f32.mrf.mxu0
    %v835 = vadd.f32 %v741, %v834
    %v836 = vpop.f32.mrf.mxu0
    %837 = vmatprep.mubr.f32.mxu0 0.0
    %838 = vmatmul.mubr.f32.gmra.mxu0 %v758
    %v839 = vpop.f32.mrf.mxu0
    %v840 = vadd.f32 %v745, %v839
    %v841 = vpop.f32.mrf.mxu0
    %842 = vmatprep.mubr.f32.mxu0 0.0
    %843 = vmatmul.mubr.f32.gmra.mxu0 %v761
    %v844 = vpop.f32.mrf.mxu0
    %v845 = vadd.f32 %v749, %v844
    %v846 = vpop.f32.mrf.mxu0
    %847 = vdwg.mxu0
    %v848 = vsel %vm447, %v830, 0.0
    %v849 = vsel %vm447, %v835, 0.0
    %v850 = vadd.f32 %v848, %v849
    %v851 = vsel %vm447, %v840, 0.0
    %v852 = vadd.f32 %v850, %v851
    %v853 = vsel %vm447, %v845, 0.0
    %v854 = vadd.f32 %v852, %v853
    %v855 = vrot.slane %v854, 4
    %v856 = vadd.f32 %v854, %v855
    %v857 = vrot.slane %v856, 2
    %v858 = vadd.f32 %v856, %v857
    %v859 = vrot.slane %v858, 1
    %v860 = vadd.f32 %v858, %v859
    %v861 = vmul.f32 %v860, %v461
    %v862 = vsub.f32 %v830, %v861
    %v863 = vsub.f32 %v835, %v861
    %v864 = vsub.f32 %v840, %v861
    %v865 = vsub.f32 %v845, %v861
    %v866 = vmul.f32 %v862, %v862
    %v867 = vmul.f32 %v863, %v863
    %v868 = vmul.f32 %v864, %v864
    %v869 = vmul.f32 %v865, %v865
    %v870 = vsel %vm447, %v866, 0.0
    %v871 = vsel %vm447, %v867, 0.0
    %v872 = vadd.f32 %v870, %v871
    %v873 = vsel %vm447, %v868, 0.0
    %v874 = vadd.f32 %v872, %v873
    %v875 = vsel %vm447, %v869, 0.0
    %v876 = vadd.f32 %v874, %v875
    %v877 = vrot.slane %v876, 4
    %v878 = vadd.f32 %v876, %v877
    %v879 = vrot.slane %v878, 2
    %v880 = vadd.f32 %v878, %v879
    %v881 = vrot.slane %v880, 1
    %v882 = vadd.f32 %v880, %v881
    %v883 = vmul.f32 %v882, %v461
    %v884 = vadd.f32 %v883, 1e-05
    %v885 = vrsqrt.pop %v884
    %v886 = vmul.f32 %v862, %v885
    %v887 = vmul.f32 %v863, %v885
    %v888 = vmul.f32 %v864, %v885
    %v889 = vmul.f32 %v865, %v885
    %890 = vset.pattern.permute.xlu0 7
    %891 = vperm.xlu0 %890, %v338
    %v892 = vpop.permute.xlu0 %891
    %894 = vset.pattern.permute.xlu0 7
    %895 = vperm.xlu0 %894, %v339
    %v896 = vpop.permute.xlu0 %895
    %898 = vset.pattern.permute.xlu0 7
    %899 = vperm.xlu0 %898, %v340
    %v900 = vpop.permute.xlu0 %899
    %902 = vset.pattern.permute.xlu0 7
    %903 = vperm.xlu0 %902, %v341
    %v904 = vpop.permute.xlu0 %903
    %v906 = vmul.f32 %v886, %v892
    %v907 = vmul.f32 %v887, %v896
    %v908 = vmul.f32 %v888, %v900
    %v909 = vmul.f32 %v889, %v904
    %910 = vset.pattern.permute.xlu0 8
    %911 = vperm.xlu0 %910, %v338
    %v912 = vpop.permute.xlu0 %911
    %914 = vset.pattern.permute.xlu0 8
    %915 = vperm.xlu0 %914, %v339
    %v916 = vpop.permute.xlu0 %915
    %918 = vset.pattern.permute.xlu0 8
    %919 = vperm.xlu0 %918, %v340
    %v920 = vpop.permute.xlu0 %919
    %922 = vset.pattern.permute.xlu0 8
    %923 = vperm.xlu0 %922, %v341
    %v924 = vpop.permute.xlu0 %923
    %v926 = vadd.f32 %v906, %v912
    %v927 = vadd.f32 %v907, %v916
    %v928 = vadd.f32 %v908, %v920
    %v929 = vadd.f32 %v909, %v924
    %v930 = vmax.f32 %v926, 0.0
    %v931 = vmax.f32 %v927, 0.0
    %v932 = vmax.f32 %v928, 0.0
    %v933 = vmax.f32 %v929, 0.0
    %934 = vset.pattern.permute.xlu0 9
    %935 = vperm.xlu0 %934, %v338
    %v936 = vpop.permute.xlu0 %935
    %v939 = vsel %vm551, %v337, 0
    %941 = vmatprep.subr.mxu0 0.0
    %942 = vmatpush1.msra.mxu0 0.0
    %943 = vmatprep.subr.mxu0 0.0
    %944 = vmatpush1.msra.mxu0 0.0
    %945 = vmatprep.subr.mxu0 0.0
    %946 = vmatpush1.msra.mxu0 0.0
    %947 = vmatprep.subr.mxu0 0.0
    %948 = vmatpush1.msra.mxu0 0.0
    %949 = vmatprep.subr.mxu0 0.0
    %950 = vmatpush1.msra.mxu0 0.0
    %951 = vmatprep.subr.mxu0 0.0
    %952 = vmatpush1.msra.mxu0 0.0
    %953 = vmatprep.subr.mxu0 0.0
    %954 = vmatpush1.msra.mxu0 0.0
    %955 = vmatprep.subr.mxu0 0.0
    %956 = vmatpush1.msra.mxu0 0.0
    %957 = vmatprep.subr.mxu0 0.0
    %958 = vmatpush1.msra.mxu0 0.0
    %959 = vmatprep.subr.mxu0 0.0
    %960 = vmatpush1.msra.mxu0 0.0
    %961 = vmatprep.subr.mxu0 0.0
    %962 = vmatpush1.msra.mxu0 0.0
    %963 = vmatprep.subr.mxu0 0.0
    %964 = vmatpush1.msra.mxu0 0.0
    %965 = vmatprep.subr.mxu0 0.0
    %966 = vmatpush1.msra.mxu0 %v933
    %967 = vmatprep.subr.mxu0 0.0
    %968 = vmatpush1.msra.mxu0 %v932
    %969 = vmatprep.subr.mxu0 0.0
    %970 = vmatpush1.msra.mxu0 %v931
    %971 = vmatprep.subr.mxu0 0.0
    %972 = vmatpush1.msra.mxu0 %v930
    %973 = vmatprep.subr.mxu0 0.0
    %974 = vmatpush2.msra.mxu0 0.0
    %975 = vmatprep.subr.mxu0 0.0
    %976 = vmatpush2.msra.mxu0 0.0
    %977 = vmatprep.subr.mxu0 0.0
    %978 = vmatpush2.msra.mxu0 0.0
    %979 = vmatprep.subr.mxu0 0.0
    %980 = vmatpush2.msra.mxu0 0.0
    %981 = vmatprep.subr.mxu0 0.0
    %982 = vmatpush2.msra.mxu0 0.0
    %983 = vmatprep.subr.mxu0 0.0
    %984 = vmatpush2.msra.mxu0 0.0
    %985 = vmatprep.subr.mxu0 0.0
    %986 = vmatpush2.msra.mxu0 0.0
    %987 = vmatprep.subr.mxu0 0.0
    %988 = vmatpush2.msra.mxu0 0.0
    %989 = vmatprep.subr.mxu0 0.0
    %990 = vmatpush2.msra.mxu0 0.0
    %991 = vmatprep.subr.mxu0 0.0
    %992 = vmatpush2.msra.mxu0 0.0
    %993 = vmatprep.subr.mxu0 0.0
    %994 = vmatpush2.msra.mxu0 0.0
    %995 = vmatprep.subr.mxu0 0.0
    %996 = vmatpush2.msra.mxu0 0.0
    %997 = vmatprep.subr.mxu0 0.0
    %998 = vmatpush2.msra.mxu0 0.0
    %999 = vmatprep.subr.mxu0 0.0
    %1000 = vmatpush2.msra.mxu0 0.0
    %1001 = vmatprep.subr.mxu0 0.0
    %1002 = vmatpush2.msra.mxu0 0.0
    %1003 = vmatprep.subr.mxu0 0.0
    %1004 = vmatpush2.msra.mxu0 0.0
    %1005 = vmatprep.mubr.f32.mxu0 0.0
    %1006 = vmatmul.mubr.f32.gmra.mxu0 %v939
    %v1007 = vpop.f32.mrf.mxu0
    %v1008 = vadd.f32 %v936, %v1007
    %v1009 = vpop.f32.mrf.mxu0
    %1010 = vdwg.mxu0
    %vm1011 = vcmask 59392
    %1012 = vst.msk [vmem:[#allocation2] sm:$0x7] %vm1011, %v1008
    // Predicated region
    $region14: #{learned_ray_forward.1} parent=1 // pred_check
      _
    $region15: #{learned_ray_forward.1} parent=1 // pred_check_branch
      %1014 = sbr.rel (0) target = $region17
    $region16: #{learned_ray_forward.1} parent=1 // pred_region
      %s1016 = ssub.s32 64, 64
      %1017 = vsyncadd [#allocation3], %s1016
      %s1019 = sshll.u32 [#allocation2], 4
      %s1020 = int_to_ptr.vmem [resolvable:$true] %s1019
      %1022 = dma.vmem_to_hbm [thread:$0]  %s1020, 64, %s3, [#allocation3]
    $region17: #{learned_ray_forward.1} parent=1 // pred_fallthru
      _
    // Predicated region
    $region18: #{learned_ray_forward.1} parent=1 // pred_check
      _
    $region19: #{learned_ray_forward.1} parent=1 // pred_check_branch
      %1024 = sbr.rel (0) target = $region21
    $region20: #{learned_ray_forward.1} parent=1 // pred_region
      %1025 = dma.done [#allocation3], 64
    $region21: #{learned_ray_forward.1} parent=1 // pred_fallthru
      _
    %1026 = vsyncpa [#allocation3], 1

</llo_original>
